<compile_context>
chip_gen: v7x
topology: tpu7x:2x2x1
jax: 0.10.0
libtpu: 0.0.40
codegen_flags: <defaults>
</compile_context>

<pallas_src>
import functools

import jax
import jax.numpy as jnp
from jax.experimental import pallas as pl
from jax.experimental.pallas import tpu as pltpu


def mlp_kernel(x_ref, w1_ref, b1_ref, w2_ref, b2_ref, o_ref):
    """One batch tile of: relu(x @ W1 + b1) @ W2 + b2."""
    x = x_ref[...]                                                     # (tb, D)
    h = jnp.dot(x, w1_ref[...], preferred_element_type=jnp.float32)    # (tb, H) on MXU
    h = jnp.maximum(h + b1_ref[...], 0.0)                              # bias + ReLU on VPU
    # Dropout(p=0.5): identity in eval mode.
    # TODO(synk): training-mode dropout (Bernoulli mask via pltpu.prng_random_bits + 2.0
    # scaling) not implemented.
    o = jnp.dot(h, w2_ref[...], preferred_element_type=jnp.float32)    # (tb, C) on MXU
    o_ref[...] = (o + b2_ref[...]).astype(o_ref.dtype)                 # narrow (masked) store


def _round_up(n, m):
    return ((n + m - 1) // m) * m


@functools.partial(jax.jit, static_argnames=("block_b",))
def nn_128x128_forward(x, w1_t, b1, w2_t, b2, *, block_b=1024):
    """x: (B, D) f32; w1_t: (D, H); b1: (1, H); w2_t: (H, C); b2: (1, C) -> (B, C)."""
    B, D = x.shape
    H = w1_t.shape[1]
    C = w2_t.shape[1]

    # Tile-count-first tiling: at least 2 tiles (so v7x's two TensorCores both get work)
    # when the batch allows it, at most cdiv(B, 8) tiles (>=8 rows per tile), and enough
    # tiles that no tile exceeds block_b rows.  Ragged tails are handled by Pallas edge
    # masking -- no jnp.pad / extra HBM pass.
    n_tiles = max(1, min(pl.cdiv(B, 8), max(2, pl.cdiv(B, block_b))))
    tb = _round_up(pl.cdiv(B, n_tiles), 8)
    grid = (pl.cdiv(B, tb),)

    return pl.pallas_call(
        mlp_kernel,
        out_shape=jax.ShapeDtypeStruct((B, C), x.dtype),
        grid_spec=pltpu.PrefetchScalarGridSpec(
            num_scalar_prefetch=0,
            grid=grid,
            in_specs=[
                pl.BlockSpec((tb, D), lambda i: (i, 0)),   # x batch tile (pipelined)
                pl.BlockSpec((D, H), lambda i: (0, 0)),    # W1^T (resident, full extent)
                pl.BlockSpec((1, H), lambda i: (0, 0)),    # b1   (resident)
                pl.BlockSpec((H, C), lambda i: (0, 0)),    # W2^T (resident)
                pl.BlockSpec((1, C), lambda i: (0, 0)),    # b2   (resident)
            ],
            out_specs=pl.BlockSpec((tb, C), lambda i: (i, 0)),  # narrow real-width output
        ),
        compiler_params=pltpu.CompilerParams(
            dimension_semantics=("parallel",),  # batch tiles shard across TCs on v7x
        ),
    )(x, w1_t, b1, w2_t, b2)


def reference_forward(x, w1_t, b1, w2_t, b2):
    h = jnp.maximum(x @ w1_t + b1, 0.0)
    return h @ w2_t + b2


if __name__ == "__main__":
    # Module config: input is already flat features of size data_size.
    data_size = 128     # fc1 in_features
    hidden = 64         # fc1 out_features
    num_classes = 10    # fc2 out_features
    batch = 16          # small batch -> 2 parallel grid steps of 8 rows each

    key = jax.random.PRNGKey(0)
    kx, k1, k2, k3, k4 = jax.random.split(key, 5)

    # Deterministic synthetic parameters (PyTorch-Linear-like uniform fan-in init),
    # weights generated pre-transposed as (in_features, out_features).
    bound1 = 1.0 / (data_size ** 0.5)
    bound2 = 1.0 / (hidden ** 0.5)
    x = jax.random.normal(kx, (batch, data_size), dtype=jnp.float32)
    w1_t = jax.random.uniform(k1, (data_size, hidden), jnp.float32, -bound1, bound1)
    b1 = jax.random.uniform(k2, (1, hidden), jnp.float32, -bound1, bound1)
    w2_t = jax.random.uniform(k3, (hidden, num_classes), jnp.float32, -bound2, bound2)
    b2 = jax.random.uniform(k4, (1, num_classes), jnp.float32, -bound2, bound2)

    ref = reference_forward(x, w1_t, b1, w2_t, b2)

    # Aligned-batch path: 2 tiles of 8 rows, no padding anywhere.
    out = nn_128x128_forward(x, w1_t, b1, w2_t, b2)
    out = jax.block_until_ready(out)
    assert out.shape == (batch, num_classes)
    assert jnp.allclose(out, ref, atol=1e-4, rtol=1e-4), "mismatch vs JAX reference"

    # Ragged-batch path (B=7 not a multiple of 8; exercises edge-block masking).
    out_small = nn_128x128_forward(x[:7], w1_t, b1, w2_t, b2)
    out_small = jax.block_until_ready(out_small)
    assert out_small.shape == (7, num_classes)
    assert jnp.allclose(out_small, ref[:7], atol=1e-4, rtol=1e-4), "ragged-batch mismatch"

    print("KERNEL_OK")
</pallas_src>

<mosaic_0001>
module attributes {stable_mosaic.version = 11 : i64} {
  func.func @mlp_kernel(%arg0: i32, %arg1: memref<8x128xf32, #tpu.memory_space<vmem>>, %arg2: memref<128x64xf32, #tpu.memory_space<vmem>>, %arg3: memref<1x64xf32, #tpu.memory_space<vmem>>, %arg4: memref<64x10xf32, #tpu.memory_space<vmem>>, %arg5: memref<1x10xf32, #tpu.memory_space<vmem>>, %arg6: memref<8x10xf32, #tpu.memory_space<vmem>>) attributes {dimension_semantics = [#tpu.dimension_semantics<parallel>], iteration_bounds = array<i64: 2>, scalar_prefetch = 0 : i64, scratch_operands = 0 : i64, tpu.core_type = #tpu.core_type<tc>, window_params = [{transform_indices = @transform_0, window_bounds = array<i64: 8, 128>}, {pipeline_mode = #tpu.pipeline_mode<synchronous>, transform_indices = @transform_1, window_bounds = array<i64: 128, 64>}, {pipeline_mode = #tpu.pipeline_mode<synchronous>, transform_indices = @transform_2, window_bounds = array<i64: 1, 64>}, {pipeline_mode = #tpu.pipeline_mode<synchronous>, transform_indices = @transform_3, window_bounds = array<i64: 64, 10>}, {pipeline_mode = #tpu.pipeline_mode<synchronous>, transform_indices = @transform_4, window_bounds = array<i64: 1, 10>}, {transform_indices = @transform_5, window_bounds = array<i64: 8, 10>}]} {
    %c0 = arith.constant 0 : index
    %c0_0 = arith.constant 0 : index
    %0 = vector.load %arg1[%c0, %c0_0] : memref<8x128xf32, #tpu.memory_space<vmem>>, vector<8x128xf32>
    %c0_1 = arith.constant 0 : index
    %c0_2 = arith.constant 0 : index
    %1 = vector.load %arg2[%c0_1, %c0_2] : memref<128x64xf32, #tpu.memory_space<vmem>>, vector<128x64xf32>
    %cst = arith.constant dense<0.000000e+00> : vector<8x64xf32>
    %2 = tpu.matmul %0, %1, %cst {dimension_numbers = #tpu.dot_dimension_numbers<[1], [0], [0], [1], [0, 0, 1, 1], [], []>} : vector<8x128xf32>, vector<128x64xf32>, vector<8x64xf32> -> vector<8x64xf32>
    %c0_3 = arith.constant 0 : index
    %c0_4 = arith.constant 0 : index
    %3 = vector.load %arg3[%c0_3, %c0_4] : memref<1x64xf32, #tpu.memory_space<vmem>>, vector<1x64xf32>
    %4 = vector.broadcast %3 : vector<1x64xf32> to vector<8x64xf32>
    %5 = arith.addf %2, %4 : vector<8x64xf32>
    %cst_5 = arith.constant 0.000000e+00 : f32
    %6 = vector.broadcast %cst_5 : f32 to vector<8x64xf32>
    %7 = arith.maximumf %5, %6 : vector<8x64xf32>
    %c0_6 = arith.constant 0 : index
    %c0_7 = arith.constant 0 : index
    %8 = vector.load %arg4[%c0_6, %c0_7] : memref<64x10xf32, #tpu.memory_space<vmem>>, vector<64x10xf32>
    %cst_8 = arith.constant dense<0.000000e+00> : vector<8x10xf32>
    %9 = tpu.matmul %7, %8, %cst_8 {dimension_numbers = #tpu.dot_dimension_numbers<[1], [0], [0], [1], [0, 0, 1, 1], [], []>} : vector<8x64xf32>, vector<64x10xf32>, vector<8x10xf32> -> vector<8x10xf32>
    %c0_9 = arith.constant 0 : index
    %c0_10 = arith.constant 0 : index
    %10 = vector.load %arg5[%c0_9, %c0_10] : memref<1x10xf32, #tpu.memory_space<vmem>>, vector<1x10xf32>
    %11 = vector.broadcast %10 : vector<1x10xf32> to vector<8x10xf32>
    %12 = arith.addf %9, %11 : vector<8x10xf32>
    %c0_11 = arith.constant 0 : index
    %c0_12 = arith.constant 0 : index
    %13 = vector.load %arg6[%c0_11, %c0_12] : memref<8x10xf32, #tpu.memory_space<vmem>>, vector<8x10xf32>
    tpu.vector_store %arg6[%c0_11, %c0_12], %12 {strides = array<i32>} : memref<8x10xf32, #tpu.memory_space<vmem>>, vector<8x10xf32>,
    return
  }
  func.func @transform_0(%arg0: i32) -> (i32, i32) {
    %c0_i32 = arith.constant 0 : i32
    %c0_i32_0 = arith.constant 0 : i32
    return %arg0, %c0_i32 : i32, i32
  }
  func.func @transform_1(%arg0: i32) -> (i32, i32) {
    %c0_i32 = arith.constant 0 : i32
    %c0_i32_0 = arith.constant 0 : i32
    %c0_i32_1 = arith.constant 0 : i32
    return %c0_i32, %c0_i32_0 : i32, i32
  }
  func.func @transform_2(%arg0: i32) -> (i32, i32) {
    %c0_i32 = arith.constant 0 : i32
    %c0_i32_0 = arith.constant 0 : i32
    %c0_i32_1 = arith.constant 0 : i32
    return %c0_i32, %c0_i32_0 : i32, i32
  }
  func.func @transform_3(%arg0: i32) -> (i32, i32) {
    %c0_i32 = arith.constant 0 : i32
    %c0_i32_0 = arith.constant 0 : i32
    %c0_i32_1 = arith.constant 0 : i32
    return %c0_i32, %c0_i32_0 : i32, i32
  }
  func.func @transform_4(%arg0: i32) -> (i32, i32) {
    %c0_i32 = arith.constant 0 : i32
    %c0_i32_0 = arith.constant 0 : i32
    %c0_i32_1 = arith.constant 0 : i32
    return %c0_i32, %c0_i32_0 : i32, i32
  }
  func.func @transform_5(%arg0: i32) -> (i32, i32) {
    %c0_i32 = arith.constant 0 : i32
    %c0_i32_0 = arith.constant 0 : i32
    return %arg0, %c0_i32 : i32, i32
  }
}

</mosaic_0001>

<llo_original>
// kernel: nn_128x128_forward.1
$region0: #{nn_128x128_forward.1}
  #allocation0 [shape = 'u32[]', space=smem, size = 0x4, offset = 0x4, fixed_abs, tag = 'smem constant byte address 0x4 - core index']
  #allocation1 [shape = 'u32[144,128]{1,0:T(1,128)}', space=vmem, size = 0x12000, scoped, tag = 'internal scratch']
  %s0 = inlined_call_operand.vmem [shape: f32[16,128], index: 0, kind: input, shape index: {}]
  %s1 = inlined_call_operand.vmem [shape: f32[128,64], index: 1, kind: input, shape index: {}]
  %s2 = inlined_call_operand.vmem [shape: f32[1,64], index: 2, kind: input, shape index: {}]
  %s3 = inlined_call_operand.vmem [shape: f32[64,10], index: 3, kind: input, shape index: {}]
  %s4 = inlined_call_operand.vmem [shape: f32[1,10], index: 4, kind: input, shape index: {}]
  %s5 = inlined_call_operand.hbm [shape: f32[16,10], index: 5, kind: output, shape index: {}]
  %s6 = sld [smem:[#allocation0]]
  $region53: #{nn_128x128_forward.1} parent=0
    _
  %s8 = ssub.s32 1, %s6
  %s9 = scalar_select 0, %s8, %s6
  $region1: #{nn_128x128_forward.1} parent=0
    #allocation2 [shape = 'u8[8192]{0}', space=vmem, size = 0x2000, scoped, tag = 'output window, operand 0']
    #allocation3 [shape = 's32[2]{0}', space=sflag, size = 0x8, scoped, tag = 'scoped memory for nn_128x128_forward.1']
    %10 = vsyncpa [#allocation3], 0
    %s11 = scalar_lea.sflag [#allocation3], 1
    %12 = vsyncpa %s11, 0
    loop: start=0, step=1, limit=4
    $region2: #{nn_128x128_forward.1} parent=1 // loop_pre_header
      _
    $region3: #{nn_128x128_forward.1} parent=1 // loop_header
      %s14 = sphi 0, %s18
      %p15 = scmp.ge.s32.totalorder %s14, 4
      %s24 = sphi 0, %s26
      %s27 = sphi 0, %s24
      %s28 = sphi 0, %s27
      %s44 = sphi 0, %s28
      %s48 = sphi 0, %s48
      %s50 = sphi 0, %s48
      %s51 = sphi 0, %s50
      %s65 = sphi 0, %s51
      %s69 = sphi 0, %s69
      %s71 = sphi 0, %s69
      %s72 = sphi 0, %s71
      %s86 = sphi 0, %s72
      %s90 = sphi 0, %s90
      %s92 = sphi 0, %s90
      %s93 = sphi 0, %s92
      %s107 = sphi 0, %s93
      %s111 = sphi 0, %s111
      %s113 = sphi 0, %s111
      %s114 = sphi 0, %s113
      %s128 = sphi 0, %s114
      %s134 = sphi 0, %s136
      %s137 = sphi 0, %s134
      %s138 = sphi 0, %s137
      %s154 = sphi 0, %s138
    $region4: #{nn_128x128_forward.1} parent=1 // loop_header_branch
      %17 = sbr.rel (%p15) target = $region8
    $region5: #{nn_128x128_forward.1} parent=1 // loop_body
      %s19 = ssub.s32 %s14, 1
      %s20 = ssub.s32 %s14, 2
      %s21 = sadd.s32 %s14, 1
      %s22 = ssub.s32 %s14, %s21
      %p23 = scmp.eq.s32.totalorder %s22, 0
      %s25 = sadd.s32 %s24, 1
      %s26 = scalar_select %p23, %s24, %s25
      %p29 = pneg %p23
      %p30 = scmp.eq.s32.totalorder %s14, 1
      %p31 = por %p29, %p30
      %p32 = scmp.ne.s32.totalorder %s24, %s27
      %p33 = scmp.eq.s32.totalorder %s14, 0
      %p34 = por %p32, %p33
      %p35 = scmp.ne.s32.totalorder %s24, %s27
      %p36 = scmp.eq.s32.totalorder %s19, 1
      %p37 = por %p35, %p36
      %p38 = scmp.ne.s32.totalorder %s27, %s28
      %p39 = scmp.eq.s32.totalorder %s19, 0
      %p40 = por %p38, %p39
      %p41 = scmp.ne.s32.totalorder %s27, %s28
      %p42 = scmp.eq.s32.totalorder %s20, 1
      %p43 = por %p41, %p42
      %p45 = scmp.ne.s32.totalorder %s28, %s44
      %p46 = scmp.eq.s32.totalorder %s20, 0
      %p47 = por %p45, %p46
      %s49 = sadd.s32 %s48, 1
      %p52 = scmp.eq.s32.totalorder %s14, 1
      %p53 = scmp.ne.s32.totalorder %s48, %s50
      %p54 = scmp.eq.s32.totalorder %s14, 0
      %p55 = por %p53, %p54
      %p56 = scmp.ne.s32.totalorder %s48, %s50
      %p57 = scmp.eq.s32.totalorder %s19, 1
      %p58 = por %p56, %p57
      %p59 = scmp.ne.s32.totalorder %s50, %s51
      %p60 = scmp.eq.s32.totalorder %s19, 0
      %p61 = por %p59, %p60
      %p62 = scmp.ne.s32.totalorder %s50, %s51
      %p63 = scmp.eq.s32.totalorder %s20, 1
      %p64 = por %p62, %p63
      %p66 = scmp.ne.s32.totalorder %s51, %s65
      %p67 = scmp.eq.s32.totalorder %s20, 0
      %p68 = por %p66, %p67
      %s70 = sadd.s32 %s69, 1
      %p73 = scmp.eq.s32.totalorder %s14, 1
      %p74 = scmp.ne.s32.totalorder %s69, %s71
      %p75 = scmp.eq.s32.totalorder %s14, 0
      %p76 = por %p74, %p75
      %p77 = scmp.ne.s32.totalorder %s69, %s71
      %p78 = scmp.eq.s32.totalorder %s19, 1
      %p79 = por %p77, %p78
      %p80 = scmp.ne.s32.totalorder %s71, %s72
      %p81 = scmp.eq.s32.totalorder %s19, 0
      %p82 = por %p80, %p81
      %p83 = scmp.ne.s32.totalorder %s71, %s72
      %p84 = scmp.eq.s32.totalorder %s20, 1
      %p85 = por %p83, %p84
      %p87 = scmp.ne.s32.totalorder %s72, %s86
      %p88 = scmp.eq.s32.totalorder %s20, 0
      %p89 = por %p87, %p88
      %s91 = sadd.s32 %s90, 1
      %p94 = scmp.eq.s32.totalorder %s14, 1
      %p95 = scmp.ne.s32.totalorder %s90, %s92
      %p96 = scmp.eq.s32.totalorder %s14, 0
      %p97 = por %p95, %p96
      %p98 = scmp.ne.s32.totalorder %s90, %s92
      %p99 = scmp.eq.s32.totalorder %s19, 1
      %p100 = por %p98, %p99
      %p101 = scmp.ne.s32.totalorder %s92, %s93
      %p102 = scmp.eq.s32.totalorder %s19, 0
      %p103 = por %p101, %p102
      %p104 = scmp.ne.s32.totalorder %s92, %s93
      %p105 = scmp.eq.s32.totalorder %s20, 1
      %p106 = por %p104, %p105
      %p108 = scmp.ne.s32.totalorder %s93, %s107
      %p109 = scmp.eq.s32.totalorder %s20, 0
      %p110 = por %p108, %p109
      %s112 = sadd.s32 %s111, 1
      %p115 = scmp.eq.s32.totalorder %s14, 1
      %p116 = scmp.ne.s32.totalorder %s111, %s113
      %p117 = scmp.eq.s32.totalorder %s14, 0
      %p118 = por %p116, %p117
      %p119 = scmp.ne.s32.totalorder %s111, %s113
      %p120 = scmp.eq.s32.totalorder %s19, 1
      %p121 = por %p119, %p120
      %p122 = scmp.ne.s32.totalorder %s113, %s114
      %p123 = scmp.eq.s32.totalorder %s19, 0
      %p124 = por %p122, %p123
      %p125 = scmp.ne.s32.totalorder %s113, %s114
      %p126 = scmp.eq.s32.totalorder %s20, 1
      %p127 = por %p125, %p126
      %p129 = scmp.ne.s32.totalorder %s114, %s128
      %p130 = scmp.eq.s32.totalorder %s20, 0
      %p131 = por %p129, %p130
      %s132 = ssub.s32 %s14, %s21
      %p133 = scmp.eq.s32.totalorder %s132, 0
      %s135 = sadd.s32 %s134, 1
      %s136 = scalar_select %p133, %s134, %s135
      %p139 = pneg %p133
      %p140 = scmp.eq.s32.totalorder %s14, 1
      %p141 = por %p139, %p140
      %p142 = scmp.ne.s32.totalorder %s134, %s137
      %p143 = scmp.eq.s32.totalorder %s14, 0
      %p144 = por %p142, %p143
      %p145 = scmp.ne.s32.totalorder %s134, %s137
      %p146 = scmp.eq.s32.totalorder %s19, 1
      %p147 = por %p145, %p146
      %p148 = scmp.ne.s32.totalorder %s137, %s138
      %p149 = scmp.eq.s32.totalorder %s19, 0
      %p150 = por %p148, %p149
      %p151 = scmp.ne.s32.totalorder %s137, %s138
      %p152 = scmp.eq.s32.totalorder %s20, 1
      %p153 = por %p151, %p152
      %p155 = scmp.ne.s32.totalorder %s138, %s154
      %p156 = scmp.eq.s32.totalorder %s20, 0
      %p157 = por %p155, %p156
      %p158 = scmp.le.s32.totalorder 1, %s14
      %p159 = scmp.lt.s32.totalorder %s14, 3
      %p160 = pnand %p158, %p159
      %p161 = pneg %p160
      // Predicated region
      $region9: #{nn_128x128_forward.1} parent=5 // pred_check
        _
      $region10: #{nn_128x128_forward.1} parent=5 // pred_check_branch
        %163 = sbr.rel (%p160) target = $region12
      $region11: #{nn_128x128_forward.1} parent=5 // pred_region
        %s164 = ssub.s32 %s14, 1
        // Predicated region
        $region13: #{nn_128x128_forward.1} parent=11 // pred_check
          %p165 = pneg %p61
        $region14: #{nn_128x128_forward.1} parent=11 // pred_check_branch
          %167 = sbr.rel (%p165) target = $region16
        $region15: #{nn_128x128_forward.1} parent=11 // pred_region
          _
        $region16: #{nn_128x128_forward.1} parent=11 // pred_fallthru
          _
        // Predicated region
        $region17: #{nn_128x128_forward.1} parent=11 // pred_check
          %p168 = pneg %p82
        $region18: #{nn_128x128_forward.1} parent=11 // pred_check_branch
          %170 = sbr.rel (%p168) target = $region20
        $region19: #{nn_128x128_forward.1} parent=11 // pred_region
          _
        $region20: #{nn_128x128_forward.1} parent=11 // pred_fallthru
          _
        // Predicated region
        $region21: #{nn_128x128_forward.1} parent=11 // pred_check
          %p171 = pneg %p103
        $region22: #{nn_128x128_forward.1} parent=11 // pred_check_branch
          %173 = sbr.rel (%p171) target = $region24
        $region23: #{nn_128x128_forward.1} parent=11 // pred_region
          _
        $region24: #{nn_128x128_forward.1} parent=11 // pred_fallthru
          _
        // Predicated region
        $region25: #{nn_128x128_forward.1} parent=11 // pred_check
          %p174 = pneg %p124
        $region26: #{nn_128x128_forward.1} parent=11 // pred_check_branch
          %176 = sbr.rel (%p174) target = $region28
        $region27: #{nn_128x128_forward.1} parent=11 // pred_region
          _
        $region28: #{nn_128x128_forward.1} parent=11 // pred_fallthru
          _
      $region12: #{nn_128x128_forward.1} parent=5 // pred_fallthru
        _
      %p177 = scmp.lt.s32.totalorder %s14, 2
      // Predicated region
      $region29: #{nn_128x128_forward.1} parent=5 // pred_check
        %p178 = pneg %p177
      $region30: #{nn_128x128_forward.1} parent=5 // pred_check_branch
        %180 = sbr.rel (%p178) target = $region32
      $region31: #{nn_128x128_forward.1} parent=5 // pred_region
        // Predicated region
        $region33: #{nn_128x128_forward.1} parent=31 // pred_check
          %p181 = pneg %p34
        $region34: #{nn_128x128_forward.1} parent=31 // pred_check_branch
          %183 = sbr.rel (%p181) target = $region36
        $region35: #{nn_128x128_forward.1} parent=31 // pred_region
          %p184 = scmp.lt.s32.totalorder %s14, 1
          %s185 = scalar_select %p184, %s14, 1
          %s186 = smul.addr %s185, 8
          %s187 = scalar_lea.vmem %s0, %s186
        $region36: #{nn_128x128_forward.1} parent=31 // pred_fallthru
          _
      $region32: #{nn_128x128_forward.1} parent=5 // pred_fallthru
        _
      %p188 = scmp.le.s32.totalorder 1, %s14
      %p189 = scmp.lt.s32.totalorder %s14, 3
      %p190 = pnand %p188, %p189
      %p191 = pneg %p190
      // Predicated region
      $region37: #{nn_128x128_forward.1} parent=5 // pred_check
        _
      $region38: #{nn_128x128_forward.1} parent=5 // pred_check_branch
        %193 = sbr.rel (%p190) target = $region40
      $region39: #{nn_128x128_forward.1} parent=5 // pred_region
        %s194 = ssub.s32 %s14, 1
        %p195 = scmp.lt.s32.totalorder %s19, 1
        %s196 = scalar_select %p195, %s19, 1
        %s197 = smul.addr %s196, 8
        %s198 = scalar_lea.vmem %s0, %s197
        %p199 = pneg %p40
        %p200 = pneg %p37
        %p201 = pneg %p61
        %p202 = pneg %p58
        %p203 = pneg %p82
        %p204 = pneg %p79
        %p205 = pneg %p103
        %p206 = pneg %p100
        %p207 = pneg %p124
        %p208 = pneg %p121
        %p209 = pneg %p150
        %p210 = pneg %p147
        %s211 = sand.u32 %s137, 1
        %s212 = scalar_lea.sflag [#allocation3], %s211
        %s213 = sand.u32 %s137, 1
        %s214 = smul.addr %s213, 8
        %s215 = scalar_lea.vmem [#allocation2], %s214
        %p216 = scmp.lt.s32.totalorder %s19, 1
        %s217 = scalar_select %p216, %s19, 1
        %s218 = smul.addr %s217, 8
        %s219 = scalar_lea.vmem %s0, %s218
        %v220 = vld [vmem:[%s219] sm:$0xff]
        %v221 = vld [vmem:[%s1] sm:$0xff]
        %v222 = vld [vmem:[%s1 + $0x8] sm:$0xff]
        %v223 = vld [vmem:[%s1 + $0x10] sm:$0xff]
        %v224 = vld [vmem:[%s1 + $0x18] sm:$0xff]
        %v225 = vld [vmem:[%s1 + $0x20] sm:$0xff]
        %v226 = vld [vmem:[%s1 + $0x28] sm:$0xff]
        %v227 = vld [vmem:[%s1 + $0x30] sm:$0xff]
        %v228 = vld [vmem:[%s1 + $0x38] sm:$0xff]
        %v229 = vld [vmem:[%s1 + $0x40] sm:$0xff]
        %v230 = vld [vmem:[%s1 + $0x48] sm:$0xff]
        %v231 = vld [vmem:[%s1 + $0x50] sm:$0xff]
        %v232 = vld [vmem:[%s1 + $0x58] sm:$0xff]
        %v233 = vld [vmem:[%s1 + $0x60] sm:$0xff]
        %v234 = vld [vmem:[%s1 + $0x68] sm:$0xff]
        %v235 = vld [vmem:[%s1 + $0x70] sm:$0xff]
        %v236 = vld [vmem:[%s1 + $0x78] sm:$0xff]
        %v237 = vld [vmem:[%s2] sm:$0x1]
        %v239 = vlaneseq
        %v240 = vshrl.u32 %v239, 7
        %v241 = vsub.s32 0, %v240
        %v242 = vrot.slane %v237, %v241
        %244 = vmatprep.subr.mxu0 0.0
        %245 = vmatpush1.msra.mxu0 %v221
        %246 = vmatprep.subr.mxu0 0.0
        %247 = vmatpush1.msra.mxu0 %v222
        %248 = vmatprep.subr.mxu0 0.0
        %249 = vmatpush1.msra.mxu0 %v223
        %250 = vmatprep.subr.mxu0 0.0
        %251 = vmatpush1.msra.mxu0 %v224
        %252 = vmatprep.subr.mxu0 0.0
        %253 = vmatpush1.msra.mxu0 %v225
        %254 = vmatprep.subr.mxu0 0.0
        %255 = vmatpush1.msra.mxu0 %v226
        %256 = vmatprep.subr.mxu0 0.0
        %257 = vmatpush1.msra.mxu0 %v227
        %258 = vmatprep.subr.mxu0 0.0
        %259 = vmatpush1.msra.mxu0 %v228
        %260 = vmatprep.subr.mxu0 0.0
        %261 = vmatpush1.msra.mxu0 %v229
        %262 = vmatprep.subr.mxu0 0.0
        %263 = vmatpush1.msra.mxu0 %v230
        %264 = vmatprep.subr.mxu0 0.0
        %265 = vmatpush1.msra.mxu0 %v231
        %266 = vmatprep.subr.mxu0 0.0
        %267 = vmatpush1.msra.mxu0 %v232
        %268 = vmatprep.subr.mxu0 0.0
        %269 = vmatpush1.msra.mxu0 %v233
        %270 = vmatprep.subr.mxu0 0.0
        %271 = vmatpush1.msra.mxu0 %v234
        %272 = vmatprep.subr.mxu0 0.0
        %273 = vmatpush1.msra.mxu0 %v235
        %274 = vmatprep.subr.mxu0 0.0
        %275 = vmatpush1.msra.mxu0 %v236
        %276 = vmatprep.subr.mxu0 0.0
        %277 = vmatpush1.msra.mxu0 0.0
        %278 = vmatprep.subr.mxu0 0.0
        %279 = vmatpush1.msra.mxu0 0.0
        %280 = vmatprep.subr.mxu0 0.0
        %281 = vmatpush1.msra.mxu0 0.0
        %282 = vmatprep.subr.mxu0 0.0
        %283 = vmatpush1.msra.mxu0 0.0
        %284 = vmatprep.subr.mxu0 0.0
        %285 = vmatpush1.msra.mxu0 0.0
        %286 = vmatprep.subr.mxu0 0.0
        %287 = vmatpush1.msra.mxu0 0.0
        %288 = vmatprep.subr.mxu0 0.0
        %289 = vmatpush1.msra.mxu0 0.0
        %290 = vmatprep.subr.mxu0 0.0
        %291 = vmatpush1.msra.mxu0 0.0
        %292 = vmatprep.subr.mxu0 0.0
        %293 = vmatpush1.msra.mxu0 0.0
        %294 = vmatprep.subr.mxu0 0.0
        %295 = vmatpush1.msra.mxu0 0.0
        %296 = vmatprep.subr.mxu0 0.0
        %297 = vmatpush1.msra.mxu0 0.0
        %298 = vmatprep.subr.mxu0 0.0
        %299 = vmatpush1.msra.mxu0 0.0
        %300 = vmatprep.subr.mxu0 0.0
        %301 = vmatpush1.msra.mxu0 0.0
        %302 = vmatprep.subr.mxu0 0.0
        %303 = vmatpush1.msra.mxu0 0.0
        %304 = vmatprep.subr.mxu0 0.0
        %305 = vmatpush1.msra.mxu0 0.0
        %306 = vmatprep.subr.mxu0 0.0
        %307 = vmatpush1.msra.mxu0 0.0
        %308 = vmatprep.mubr.f32.mxu0 0.0
        %309 = vmatmul.mubr.f32.gmra.mrb[0].mxu0 %v220
        %v310 = vpop.f32.mrb[0].mxu0
        %v311 = vadd.f32 %v242, %v310
        %v312 = vpop.f32.mrb[0].mxu0
        %313 = vdwg.mxu0
        %v314 = vmax.f32 %v311, 0.0
        %v315 = vld [vmem:[%s3] sm:$0xff]
        %v316 = vld [vmem:[%s3 + $0x8] sm:$0xff]
        %v317 = vld [vmem:[%s3 + $0x10] sm:$0xff]
        %v318 = vld [vmem:[%s3 + $0x18] sm:$0xff]
        %v319 = vld [vmem:[%s3 + $0x20] sm:$0xff]
        %v320 = vld [vmem:[%s3 + $0x28] sm:$0xff]
        %v321 = vld [vmem:[%s3 + $0x30] sm:$0xff]
        %v322 = vld [vmem:[%s3 + $0x38] sm:$0xff]
        %v323 = vld [vmem:[%s4] sm:$0x1]
        %v325 = vlaneseq
        %v326 = vshrl.u32 %v325, 7
        %v327 = vsub.s32 0, %v326
        %v328 = vrot.slane %v323, %v327
        %vm330 = vcmask 523264
        %v332 = vsel %vm330, %v314, 0
        %334 = vmatprep.subr.mxu0 0.0
        %335 = vmatpush1.msra.mxu0 %v315
        %336 = vmatprep.subr.mxu0 0.0
        %337 = vmatpush1.msra.mxu0 %v316
        %338 = vmatprep.subr.mxu0 0.0
        %339 = vmatpush1.msra.mxu0 %v317
        %340 = vmatprep.subr.mxu0 0.0
        %341 = vmatpush1.msra.mxu0 %v318
        %342 = vmatprep.subr.mxu0 0.0
        %343 = vmatpush1.msra.mxu0 %v319
        %344 = vmatprep.subr.mxu0 0.0
        %345 = vmatpush1.msra.mxu0 %v320
        %346 = vmatprep.subr.mxu0 0.0
        %347 = vmatpush1.msra.mxu0 %v321
        %348 = vmatprep.subr.mxu0 0.0
        %349 = vmatpush1.msra.mxu0 %v322
        %350 = vmatprep.subr.mxu0 0.0
        %351 = vmatpush1.msra.mxu0 0.0
        %352 = vmatprep.subr.mxu0 0.0
        %353 = vmatpush1.msra.mxu0 0.0
        %354 = vmatprep.subr.mxu0 0.0
        %355 = vmatpush1.msra.mxu0 0.0
        %356 = vmatprep.subr.mxu0 0.0
        %357 = vmatpush1.msra.mxu0 0.0
        %358 = vmatprep.subr.mxu0 0.0
        %359 = vmatpush1.msra.mxu0 0.0
        %360 = vmatprep.subr.mxu0 0.0
        %361 = vmatpush1.msra.mxu0 0.0
        %362 = vmatprep.subr.mxu0 0.0
        %363 = vmatpush1.msra.mxu0 0.0
        %364 = vmatprep.subr.mxu0 0.0
        %365 = vmatpush1.msra.mxu0 0.0
        %366 = vmatprep.subr.mxu0 0.0
        %367 = vmatpush1.msra.mxu0 0.0
        %368 = vmatprep.subr.mxu0 0.0
        %369 = vmatpush1.msra.mxu0 0.0
        %370 = vmatprep.subr.mxu0 0.0
        %371 = vmatpush1.msra.mxu0 0.0
        %372 = vmatprep.subr.mxu0 0.0
        %373 = vmatpush1.msra.mxu0 0.0
        %374 = vmatprep.subr.mxu0 0.0
        %375 = vmatpush1.msra.mxu0 0.0
        %376 = vmatprep.subr.mxu0 0.0
        %377 = vmatpush1.msra.mxu0 0.0
        %378 = vmatprep.subr.mxu0 0.0
        %379 = vmatpush1.msra.mxu0 0.0
        %380 = vmatprep.subr.mxu0 0.0
        %381 = vmatpush1.msra.mxu0 0.0
        %382 = vmatprep.subr.mxu0 0.0
        %383 = vmatpush1.msra.mxu0 0.0
        %384 = vmatprep.subr.mxu0 0.0
        %385 = vmatpush1.msra.mxu0 0.0
        %386 = vmatprep.subr.mxu0 0.0
        %387 = vmatpush1.msra.mxu0 0.0
        %388 = vmatprep.subr.mxu0 0.0
        %389 = vmatpush1.msra.mxu0 0.0
        %390 = vmatprep.subr.mxu0 0.0
        %391 = vmatpush1.msra.mxu0 0.0
        %392 = vmatprep.subr.mxu0 0.0
        %393 = vmatpush1.msra.mxu0 0.0
        %394 = vmatprep.subr.mxu0 0.0
        %395 = vmatpush1.msra.mxu0 0.0
        %396 = vmatprep.subr.mxu0 0.0
        %397 = vmatpush1.msra.mxu0 0.0
        %398 = vmatprep.mubr.f32.mxu0 0.0
        %399 = vmatmul.mubr.f32.gmra.mrb[0].mxu0 %v332
        %v400 = vpop.f32.mrb[0].mxu0
        %v401 = vadd.f32 %v328, %v400
        %v402 = vpop.f32.mrb[0].mxu0
        %403 = vdwg.mxu0
        %vm404 = vcmask 80896
        %405 = vst.msk [vmem:[%s215] sm:$0xff] %vm404, %v401
        %s406 = sand.u32 %s137, 1
        %s407 = scalar_lea.sflag [#allocation3], %s406
        %s408 = sand.u32 %s137, 1
        %s409 = smul.addr %s408, 8
        %s410 = scalar_lea.vmem [#allocation2], %s409
        // Predicated region
        $region41: #{nn_128x128_forward.1} parent=39 // pred_check
          %p411 = pneg %p147
        $region42: #{nn_128x128_forward.1} parent=39 // pred_check_branch
          %413 = sbr.rel (%p411) target = $region44
        $region43: #{nn_128x128_forward.1} parent=39 // pred_region
          %s415 = ssub.s32 128, 128
          %416 = vsyncadd %s407, %s415
          %s417 = smul.addr %s19, 128
          %s418 = scalar_lea.hbm %s5, %s417
          %s420 = sshll.u32 %s410, 4
          %s421 = int_to_ptr.vmem [resolvable:$true] %s420
          %423 = dma.vmem_to_hbm [thread:$0]  %s421, 128, %s418, %s407
        $region44: #{nn_128x128_forward.1} parent=39 // pred_fallthru
          _
      $region40: #{nn_128x128_forward.1} parent=5 // pred_fallthru
        _
      %p424 = scmp.le.s32.totalorder 2, %s14
      // Predicated region
      $region45: #{nn_128x128_forward.1} parent=5 // pred_check
        %p425 = pneg %p424
      $region46: #{nn_128x128_forward.1} parent=5 // pred_check_branch
        %427 = sbr.rel (%p425) target = $region48
      $region47: #{nn_128x128_forward.1} parent=5 // pred_region
        %s428 = ssub.s32 %s14, 2
        // Predicated region
        $region49: #{nn_128x128_forward.1} parent=47 // pred_check
          %p429 = pneg %p153
        $region50: #{nn_128x128_forward.1} parent=47 // pred_check_branch
          %431 = sbr.rel (%p429) target = $region52
        $region51: #{nn_128x128_forward.1} parent=47 // pred_region
          %s432 = sand.u32 %s138, 1
          %s433 = scalar_lea.sflag [#allocation3], %s432
          %s434 = sand.u32 %s138, 1
          %s435 = smul.addr %s434, 8
          %s436 = scalar_lea.vmem [#allocation2], %s435
          %437 = dma.done %s433, 128
        $region52: #{nn_128x128_forward.1} parent=47 // pred_fallthru
          _
      $region48: #{nn_128x128_forward.1} parent=5 // pred_fallthru
        _
    $region6: #{nn_128x128_forward.1} parent=1 // loop_footer
      %s18 = sadd.s32 1, %s14
    $region7: #{nn_128x128_forward.1} parent=1 // loop_footer_branch
      %13 = sbr.rel target = $region3
    $region8: #{nn_128x128_forward.1} parent=1 // loop_exit
      _
    %438 = vsyncpa [#allocation3], 1
    %s439 = scalar_lea.sflag [#allocation3], 1
    %440 = vsyncpa %s439, 1

</llo_original>
